<compile_context>
chip_gen: v6e
topology: v6e:2x2x1
jax: 0.10.0
libtpu: 0.0.40
codegen_flags: <defaults>
</compile_context>

<pallas_src>
import jax
import jax.numpy as jnp
from jax.experimental import pallas as pl
from jax.experimental.pallas import tpu as pltpu

SCALES = (1, 2, 4)


def _pool_matrix(H, W, k):
    """(H*W, (H//k)*(W//k)) matrix: right-multiplying a row-major flattened image performs
    k x k average pooling (== F.avg_pool2d(kernel_size=k, stride=k) for divisible H, W)."""
    ph, pw = H // k, W // k
    h_dst = jnp.arange(H) // k                                   # (H,)
    w_dst = jnp.arange(W) // k                                   # (W,)
    src_to_dst = (h_dst[:, None] * pw + w_dst[None, :]).reshape(H * W)   # (HW,)
    onehot = (src_to_dst[:, None] == jnp.arange(ph * pw)[None, :])
    return onehot.astype(jnp.float32) * jnp.float32(1.0 / (k * k))


def _make_fused_pool_matrix(H, W):
    """Concatenated, per-scale-mean-normalized pooling matrix, zero-padded to a multiple of
    128 columns so the MXU output is lane-dense; pad columns are zero so they contribute
    nothing to the abs-sum."""
    HW = H * W
    p2 = _pool_matrix(H, W, 2) * jnp.float32(4.0 / HW)    # columns carry the 1/(HW/4) mean factor
    p4 = _pool_matrix(H, W, 4) * jnp.float32(16.0 / HW)   # columns carry the 1/(HW/16) mean factor
    P = jnp.concatenate([p2, p4], axis=1)                 # (HW, HW/4 + HW/16)
    pad = (-P.shape[1]) % 128
    if pad:
        P = jnp.pad(P, ((0, 0), (0, pad)))
    return P


def msl_kernel(out_ref, tar_ref, p_ref, part_ref):
    # One (channel, batch-block) tile.  out_ref / tar_ref: (Bblk, H*W), lane-dense, native
    # dtype (cast to f32 in-kernel so bf16 inputs keep half the DMA bytes).
    d = out_ref[...].astype(jnp.float32) - tar_ref[...].astype(jnp.float32)   # (Bblk, HW)
    hw = d.shape[1]

    # scale 1: per-image pixel-mean of |d|, summed over the batch block (VPU abs + reduce).
    s = jnp.sum(jnp.abs(d)) * jnp.float32(1.0 / hw)

    # scales 2 & 4 fused: one MXU matmul (contraction = HW); pooling is linear so pooling the
    # diff equals diff of pooled images.  Columns are pre-scaled by the per-scale pixel-mean
    # factor, so one abs-sum gives  sum_b [ mean|pool2(d_b)| + mean|pool4(d_b)| ].
    pooled = jnp.dot(d, p_ref[...], preferred_element_type=jnp.float32)       # (Bblk, PW)
    s = s + jnp.sum(jnp.abs(pooled))

    # Distinct output block per grid step (no revisit -> both grid axes "parallel").
    part_ref[...] = jnp.zeros_like(part_ref) + s


def multiscale_l1_loss(outputs, targets, weights, *, target_block_bytes=1 << 20):
    """outputs, targets: [B, C, H, W]; weights: [C]. Returns scalar f32 loss."""
    B, C, H, W = outputs.shape
    assert targets.shape == outputs.shape
    assert weights.shape[0] == C
    # Divisible spatial dims (PyTorch avg_pool2d floors for non-divisible shapes; that path
    # is a semantic restriction here, not implemented).
    assert all(H % k == 0 and W % k == 0 for k in SCALES)
    HW = H * W
    # Lane-dense path requires the flattened image to tile the 128-lane vreg dimension.
    assert HW % 128 == 0, "H*W must be a multiple of 128 for the lane-dense fused path"
    # TODO(synk): for very large images (H*W >> 4096) the fused pooling matrix grows
    # quadratically; switch to the separable path (lane-dim matmul + sublane adjacent-row
    # adds) for that regime.

    w = (weights / jnp.sum(weights)).astype(jnp.float32)
    P = _make_fused_pool_matrix(H, W)                     # (HW, padded pooled width), tiny & resident

    # Batch-block size: aim for ~target_block_bytes per input block (amortizes the ~600-cycle
    # grid-step overhead); must divide B.  For small B this is simply B (block covers the full
    # batch dim, which also keeps the second-to-last block dim equal to the array dim).
    img_bytes = HW * outputs.dtype.itemsize
    cap = max(1, target_block_bytes // img_bytes)
    bblk = 1
    for cand in range(1, B + 1):
        if B % cand == 0 and cand <= cap:
            bblk = cand
    nb = B // bblk

    # Free contiguous views: channel c of batch row b is the slice [c*HW:(c+1)*HW].
    out2 = outputs.reshape(B, C * HW)
    tar2 = targets.reshape(B, C * HW)

    img_spec = pl.BlockSpec((bblk, HW), lambda c, b: (b, c))

    partials = pl.pallas_call(
        msl_kernel,
        out_shape=jax.ShapeDtypeStruct((C * nb, 1, 1), jnp.float32),
        grid=(C, nb),
        in_specs=[
            img_spec,                                      # outputs (native dtype, lane-dense)
            img_spec,                                      # targets
            pl.BlockSpec(P.shape, lambda c, b: (0, 0)),    # fused pooling matrix (constant index -> resident)
        ],
        out_specs=pl.BlockSpec((1, 1, 1), lambda c, b: (c * nb + b, 0, 0)),
        compiler_params=pltpu.CompilerParams(
            dimension_semantics=("parallel", "parallel"),
            # Explicit budget: 2 inputs x 2 pipeline buffers x ~1 MiB + f32 temps + ~0.25 MiB
            # constants stays far below this on all of v5e / v6e / v7x.
            vmem_limit_bytes=32 * 1024 * 1024,
        ),
    )(out2, tar2, P)

    # channel_loss[c] = (1/3) * sum_k mean_{B, pooled pixels} |diff_k|  = partial[c] / (3*B)
    per_channel = partials.reshape(C, nb).sum(axis=1) * jnp.float32(1.0 / (len(SCALES) * B))
    return jnp.sum(w * per_channel)


def _reference(outputs, targets, weights):
    # Pure-JAX reproduction of the PyTorch forward (4-D path) for validation.
    w = weights / jnp.sum(weights)
    B, C, H, W = outputs.shape
    total = jnp.float32(0.0)
    for i in range(C):
        ch = jnp.float32(0.0)
        for k in SCALES:
            o = outputs[:, i].reshape(B, H // k, k, W // k, k).mean(axis=(2, 4))
            t = targets[:, i].reshape(B, H // k, k, W // k, k).mean(axis=(2, 4))
            ch = ch + jnp.mean(jnp.abs(o - t))
        ch = ch / len(SCALES)
        total = total + w[i] * ch
    return total


if __name__ == "__main__":
    key = jax.random.PRNGKey(0)
    B, C, H, W = 2, 4, 16, 16
    k1, k2 = jax.random.split(key)
    outputs = jax.random.normal(k1, (B, C, H, W), dtype=jnp.float32)
    targets = jax.random.normal(k2, (B, C, H, W), dtype=jnp.float32)
    # Deterministic "weights" parameter from __init__ (len == C); normalized inside.
    weights = jnp.array([1.0, 2.0, 3.0, 4.0], dtype=jnp.float32)

    loss = multiscale_l1_loss(outputs, targets, weights)
    loss = jax.block_until_ready(loss)

    ref = float(_reference(outputs, targets, weights))
    assert abs(float(loss) - ref) < 1e-3 * max(1.0, abs(ref)), (float(loss), ref)
    print("KERNEL_OK")
</pallas_src>

<mosaic_0001>
module attributes {stable_mosaic.version = 11 : i64} {
  func.func @msl_kernel(%arg0: i32, %arg1: i32, %arg2: memref<2x256xf32, #tpu.memory_space<vmem>>, %arg3: memref<2x256xf32, #tpu.memory_space<vmem>>, %arg4: memref<256x128xf32, #tpu.memory_space<vmem>>, %arg5: memref<1x1x1xf32, #tpu.memory_space<vmem>>) attributes {dimension_semantics = [#tpu.dimension_semantics<parallel>, #tpu.dimension_semantics<parallel>], iteration_bounds = array<i64: 4, 1>, scalar_prefetch = 0 : i64, scratch_operands = 0 : i64, tpu.core_type = #tpu.core_type<tc>, window_params = [{transform_indices = @transform_0, window_bounds = array<i64: 2, 256>}, {transform_indices = @transform_1, window_bounds = array<i64: 2, 256>}, {pipeline_mode = #tpu.pipeline_mode<synchronous>, transform_indices = @transform_2, window_bounds = array<i64: 256, 128>}, {transform_indices = @transform_3, window_bounds = array<i64: 1, 1, 1>}]} {
    %c0 = arith.constant 0 : index
    %c0_0 = arith.constant 0 : index
    %0 = vector.load %arg2[%c0, %c0_0] : memref<2x256xf32, #tpu.memory_space<vmem>>, vector<2x256xf32>
    %c0_1 = arith.constant 0 : index
    %c0_2 = arith.constant 0 : index
    %1 = vector.load %arg3[%c0_1, %c0_2] : memref<2x256xf32, #tpu.memory_space<vmem>>, vector<2x256xf32>
    %2 = arith.subf %0, %1 : vector<2x256xf32>
    %3 = math.absf %2 : vector<2x256xf32>
    %4 = vector.shape_cast %3 : vector<2x256xf32> to vector<1x2x256xf32>
    %cst = arith.constant dense<0.000000e+00> : vector<1xf32>
    %5 = vector.multi_reduction <add>, %4, %cst [1, 2] : vector<1x2x256xf32> to vector<1xf32>
    %6 = vector.shape_cast %5 : vector<1xf32> to vector<1x1x1xf32>
    %7 = vector.extract %6[0, 0, 0] : f32 from vector<1x1x1xf32>
    %cst_3 = arith.constant 3.906250e-03 : f32
    %8 = arith.mulf %7, %cst_3 : f32
    %c0_4 = arith.constant 0 : index
    %c0_5 = arith.constant 0 : index
    %9 = vector.load %arg4[%c0_4, %c0_5] : memref<256x128xf32, #tpu.memory_space<vmem>>, vector<256x128xf32>
    %cst_6 = arith.constant dense<0.000000e+00> : vector<2x128xf32>
    %10 = tpu.matmul %2, %9, %cst_6 {dimension_numbers = #tpu.dot_dimension_numbers<[1], [0], [0], [1], [0, 0, 1, 1], [], []>} : vector<2x256xf32>, vector<256x128xf32>, vector<2x128xf32> -> vector<2x128xf32>
    %11 = math.absf %10 : vector<2x128xf32>
    %12 = vector.shape_cast %11 : vector<2x128xf32> to vector<1x2x128xf32>
    %cst_7 = arith.constant dense<0.000000e+00> : vector<1xf32>
    %13 = vector.multi_reduction <add>, %12, %cst_7 [1, 2] : vector<1x2x128xf32> to vector<1xf32>
    %14 = vector.shape_cast %13 : vector<1xf32> to vector<1x1x1xf32>
    %15 = vector.extract %14[0, 0, 0] : f32 from vector<1x1x1xf32>
    %16 = arith.addf %8, %15 : f32
    %cst_8 = arith.constant 0.000000e+00 : f32
    %17 = vector.broadcast %cst_8 : f32 to vector<1x1x1xf32>
    %18 = vector.broadcast %16 : f32 to vector<1x1x1xf32>
    %19 = arith.addf %17, %18 : vector<1x1x1xf32>
    %c0_9 = arith.constant 0 : index
    %c0_10 = arith.constant 0 : index
    %c0_11 = arith.constant 0 : index
    %20 = vector.load %arg5[%c0_9, %c0_10, %c0_11] : memref<1x1x1xf32, #tpu.memory_space<vmem>>, vector<1x1x1xf32>
    tpu.vector_store %arg5[%c0_9, %c0_10, %c0_11], %19 {strides = array<i32>} : memref<1x1x1xf32, #tpu.memory_space<vmem>>, vector<1x1x1xf32>,
    return
  }
  func.func @transform_0(%arg0: i32, %arg1: i32) -> (i32, i32) {
    %c0_i32 = arith.constant 0 : i32
    return %arg1, %arg0 : i32, i32
  }
  func.func @transform_1(%arg0: i32, %arg1: i32) -> (i32, i32) {
    %c0_i32 = arith.constant 0 : i32
    return %arg1, %arg0 : i32, i32
  }
  func.func @transform_2(%arg0: i32, %arg1: i32) -> (i32, i32) {
    %c0_i32 = arith.constant 0 : i32
    %c0_i32_0 = arith.constant 0 : i32
    %c0_i32_1 = arith.constant 0 : i32
    return %c0_i32, %c0_i32_0 : i32, i32
  }
  func.func @transform_3(%arg0: i32, %arg1: i32) -> (i32, i32, i32) {
    %c1_i32 = arith.constant 1 : i32
    %0 = arith.muli %arg0, %c1_i32 : i32
    %1 = arith.addi %0, %arg1 : i32
    %c0_i32 = arith.constant 0 : i32
    %c0_i32_0 = arith.constant 0 : i32
    %c0_i32_1 = arith.constant 0 : i32
    return %1, %c0_i32, %c0_i32_0 : i32, i32, i32
  }
}

</mosaic_0001>

<llo_original>
// kernel: tpu_custom_call.1
$region0: #{tpu_custom_call.1}
  #allocation0 [shape = 'u32[]', space=smem, size = 0x4, offset = 0x4, fixed_abs, tag = 'smem constant byte address 0x4 - core index']
  #allocation1 [shape = 'u32[144,128]{1,0:T(1,128)}', space=vmem, size = 0x12000, scoped, tag = 'internal scratch']
  %s0 = inlined_call_operand.hbm [shape: f32[2,1024], index: 0, kind: input, shape index: {}]
  %s1 = inlined_call_operand.hbm [shape: f32[2,1024], index: 1, kind: input, shape index: {}]
  %s2 = inlined_call_operand.hbm [shape: f32[256,128], index: 2, kind: input, shape index: {}]
  %s3 = inlined_call_operand.vmem [shape: f32[4,1,1], index: 3, kind: output, shape index: {}]
  %s4 = sld [smem:[#allocation0]]
  $region57: #{tpu_custom_call.1} parent=0
    _
  %s6 = ssub.s32 1, %s4
  %s7 = scalar_select 0, %s6, %s4
  $region1: #{tpu_custom_call.1} parent=0
    #allocation2 [shape = 'u8[4096]{0}', space=vmem, size = 0x1000, scoped, tag = 'input window, operand 0']
    #allocation3 [shape = 's32[2]{0}', space=sflag, size = 0x8, scoped, tag = 'scoped memory for tpu_custom_call.1']
    #allocation4 [shape = 'u8[4096]{0}', space=vmem, size = 0x1000, scoped, tag = 'input window, operand 1']
    #allocation5 [shape = 's32[2]{0}', space=sflag, size = 0x8, scoped, tag = 'scoped memory for tpu_custom_call.1']
    #allocation6 [shape = 'u8[131072]{0}', space=vmem, size = 0x20000, scoped, tag = 'input window, operand 2, single buffered']
    %8 = vsyncpa [#allocation3], 0
    %s9 = scalar_lea.sflag [#allocation3], 1
    %10 = vsyncpa %s9, 0
    %11 = vsyncpa [#allocation5], 0
    %s12 = scalar_lea.sflag [#allocation5], 1
    %13 = vsyncpa %s12, 0
    loop: start=0, step=1, limit=6
    $region2: #{tpu_custom_call.1} parent=1 // loop_pre_header
      _
    $region3: #{tpu_custom_call.1} parent=1 // loop_header
      %s15 = sphi 0, %s19
      %p16 = scmp.ge.s32.totalorder %s15, 6
      %s22 = sphi 0, %s34
      %s23 = sphi 0, %s30
      %s24 = sphi 0, %s22
      %s25 = sphi 0, %s23
      %s26 = sphi 0, %s24
      %s27 = sphi 0, %s25
      %s39 = sphi 0, %s41
      %s42 = sphi 0, %s39
      %s43 = sphi 0, %s42
      %s59 = sphi 0, %s43
      %s67 = sphi 0, %s69
      %s70 = sphi 0, %s67
      %s71 = sphi 0, %s70
      %s87 = sphi 0, %s71
      %s91 = sphi 0, %s91
      %s93 = sphi 0, %s91
      %s94 = sphi 0, %s93
      %s108 = sphi 0, %s94
      %s116 = sphi 0, %s118
      %s119 = sphi 0, %s116
      %s120 = sphi 0, %s119
      %s136 = sphi 0, %s120
    $region4: #{tpu_custom_call.1} parent=1 // loop_header_branch
      %18 = sbr.rel (%p16) target = $region8
    $region5: #{tpu_custom_call.1} parent=1 // loop_body
      %s20 = ssub.s32 %s15, 1
      %s21 = ssub.s32 %s15, 2
      %s28 = sadd.s32 1, %s23
      %p29 = scmp.ge.s32.totalorder %s28, 1
      %s30 = scalar_select %p29, 0, %s28
      %s31 = sadd.s32 1, %s22
      %s32 = scalar_select %p29, %s31, %s22
      %p33 = scmp.ge.s32.totalorder %s32, 4
      %s34 = scalar_select %p33, 0, %s32
      %s35 = ssub.s32 %s23, %s30
      %s36 = ssub.s32 %s22, %s34
      %s37 = sor.u32 %s35, %s36
      %p38 = scmp.eq.s32.totalorder %s37, 0
      %s40 = sadd.s32 %s39, 1
      %s41 = scalar_select %p38, %s39, %s40
      %p44 = pneg %p38
      %p45 = scmp.eq.s32.totalorder %s15, 3
      %p46 = por %p44, %p45
      %p47 = scmp.ne.s32.totalorder %s39, %s42
      %p48 = scmp.eq.s32.totalorder %s15, 0
      %p49 = por %p47, %p48
      %p50 = scmp.ne.s32.totalorder %s39, %s42
      %p51 = scmp.eq.s32.totalorder %s20, 3
      %p52 = por %p50, %p51
      %p53 = scmp.ne.s32.totalorder %s42, %s43
      %p54 = scmp.eq.s32.totalorder %s20, 0
      %p55 = por %p53, %p54
      %p56 = scmp.ne.s32.totalorder %s42, %s43
      %p57 = scmp.eq.s32.totalorder %s21, 3
      %p58 = por %p56, %p57
      %p60 = scmp.ne.s32.totalorder %s43, %s59
      %p61 = scmp.eq.s32.totalorder %s21, 0
      %p62 = por %p60, %p61
      %s63 = ssub.s32 %s23, %s30
      %s64 = ssub.s32 %s22, %s34
      %s65 = sor.u32 %s63, %s64
      %p66 = scmp.eq.s32.totalorder %s65, 0
      %s68 = sadd.s32 %s67, 1
      %s69 = scalar_select %p66, %s67, %s68
      %p72 = pneg %p66
      %p73 = scmp.eq.s32.totalorder %s15, 3
      %p74 = por %p72, %p73
      %p75 = scmp.ne.s32.totalorder %s67, %s70
      %p76 = scmp.eq.s32.totalorder %s15, 0
      %p77 = por %p75, %p76
      %p78 = scmp.ne.s32.totalorder %s67, %s70
      %p79 = scmp.eq.s32.totalorder %s20, 3
      %p80 = por %p78, %p79
      %p81 = scmp.ne.s32.totalorder %s70, %s71
      %p82 = scmp.eq.s32.totalorder %s20, 0
      %p83 = por %p81, %p82
      %p84 = scmp.ne.s32.totalorder %s70, %s71
      %p85 = scmp.eq.s32.totalorder %s21, 3
      %p86 = por %p84, %p85
      %p88 = scmp.ne.s32.totalorder %s71, %s87
      %p89 = scmp.eq.s32.totalorder %s21, 0
      %p90 = por %p88, %p89
      %s92 = sadd.s32 %s91, 1
      %p95 = scmp.eq.s32.totalorder %s15, 3
      %p96 = scmp.ne.s32.totalorder %s91, %s93
      %p97 = scmp.eq.s32.totalorder %s15, 0
      %p98 = por %p96, %p97
      %p99 = scmp.ne.s32.totalorder %s91, %s93
      %p100 = scmp.eq.s32.totalorder %s20, 3
      %p101 = por %p99, %p100
      %p102 = scmp.ne.s32.totalorder %s93, %s94
      %p103 = scmp.eq.s32.totalorder %s20, 0
      %p104 = por %p102, %p103
      %p105 = scmp.ne.s32.totalorder %s93, %s94
      %p106 = scmp.eq.s32.totalorder %s21, 3
      %p107 = por %p105, %p106
      %p109 = scmp.ne.s32.totalorder %s94, %s108
      %p110 = scmp.eq.s32.totalorder %s21, 0
      %p111 = por %p109, %p110
      %s112 = sadd.s32 %s22, %s23
      %s113 = sadd.s32 %s34, %s30
      %s114 = ssub.s32 %s112, %s113
      %p115 = scmp.eq.s32.totalorder %s114, 0
      %s117 = sadd.s32 %s116, 1
      %s118 = scalar_select %p115, %s116, %s117
      %p121 = pneg %p115
      %p122 = scmp.eq.s32.totalorder %s15, 3
      %p123 = por %p121, %p122
      %p124 = scmp.ne.s32.totalorder %s116, %s119
      %p125 = scmp.eq.s32.totalorder %s15, 0
      %p126 = por %p124, %p125
      %p127 = scmp.ne.s32.totalorder %s116, %s119
      %p128 = scmp.eq.s32.totalorder %s20, 3
      %p129 = por %p127, %p128
      %p130 = scmp.ne.s32.totalorder %s119, %s120
      %p131 = scmp.eq.s32.totalorder %s20, 0
      %p132 = por %p130, %p131
      %p133 = scmp.ne.s32.totalorder %s119, %s120
      %p134 = scmp.eq.s32.totalorder %s21, 3
      %p135 = por %p133, %p134
      %p137 = scmp.ne.s32.totalorder %s120, %s136
      %p138 = scmp.eq.s32.totalorder %s21, 0
      %p139 = por %p137, %p138
      %p140 = scmp.le.s32.totalorder 1, %s15
      %p141 = scmp.lt.s32.totalorder %s15, 5
      %p142 = pnand %p140, %p141
      %p143 = pneg %p142
      // Predicated region
      $region9: #{tpu_custom_call.1} parent=5 // pred_check
        _
      $region10: #{tpu_custom_call.1} parent=5 // pred_check_branch
        %145 = sbr.rel (%p142) target = $region12
      $region11: #{tpu_custom_call.1} parent=5 // pred_region
        %s146 = ssub.s32 %s15, 1
        // Predicated region
        $region13: #{tpu_custom_call.1} parent=11 // pred_check
          %p147 = pneg %p104
        $region14: #{tpu_custom_call.1} parent=11 // pred_check_branch
          %149 = sbr.rel (%p147) target = $region16
        $region15: #{tpu_custom_call.1} parent=11 // pred_region
          %s151 = ssub.s32 4096, 4096
          %152 = vsyncadd [#allocation5], %s151
          %s153 = sshll.u32 [#allocation6], 4
          %s154 = int_to_ptr.vmem [resolvable:$true] %s153
          %159 = dma.hbm_to_vmem [thread:$0]  %s2, 4096, %s154, [#allocation5], 128, 128, 8
        $region16: #{tpu_custom_call.1} parent=11 // pred_fallthru
          _
      $region12: #{tpu_custom_call.1} parent=5 // pred_fallthru
        _
      %p160 = scmp.lt.s32.totalorder %s15, 4
      // Predicated region
      $region17: #{tpu_custom_call.1} parent=5 // pred_check
        %p161 = pneg %p160
      $region18: #{tpu_custom_call.1} parent=5 // pred_check_branch
        %163 = sbr.rel (%p161) target = $region20
      $region19: #{tpu_custom_call.1} parent=5 // pred_region
        // Predicated region
        $region21: #{tpu_custom_call.1} parent=19 // pred_check
          %p164 = pneg %p49
        $region22: #{tpu_custom_call.1} parent=19 // pred_check_branch
          %166 = sbr.rel (%p164) target = $region24
        $region23: #{tpu_custom_call.1} parent=19 // pred_region
          %s167 = sand.u32 %s39, 1
          %s168 = scalar_lea.sflag [#allocation3], %s167
          %s169 = sand.u32 %s39, 1
          %s170 = smul.addr %s169, 4
          %s171 = scalar_lea.vmem [#allocation2], %s170
          %s172 = smul.u32 2, %s22
          %s174 = ssub.s32 64, 64
          %175 = vsyncadd %s168, %s174
          %s176 = smul.addr %s23, 8
          %s177 = sadd.s32 %s172, %s176
          %s178 = smul.addr %s177, 32
          %s179 = scalar_lea.hbm %s0, %s178
          %s181 = sshll.u32 %s171, 4
          %s182 = int_to_ptr.vmem [resolvable:$true] %s181
          %184 = dma.hbm_to_vmem [thread:$0]  %s179, 64, %s182, %s168
        $region24: #{tpu_custom_call.1} parent=19 // pred_fallthru
          _
        // Predicated region
        $region25: #{tpu_custom_call.1} parent=19 // pred_check
          %p185 = pneg %p77
        $region26: #{tpu_custom_call.1} parent=19 // pred_check_branch
          %187 = sbr.rel (%p185) target = $region28
        $region27: #{tpu_custom_call.1} parent=19 // pred_region
          %s188 = sand.u32 %s15, 1
          %s189 = scalar_lea.sflag [#allocation5], %s188
          %s190 = sand.u32 %s67, 1
          %s191 = smul.addr %s190, 4
          %s192 = scalar_lea.vmem [#allocation4], %s191
          %s193 = smul.u32 2, %s22
          %s195 = ssub.s32 64, 64
          %196 = vsyncadd %s189, %s195
          %s197 = smul.addr %s23, 8
          %s198 = sadd.s32 %s193, %s197
          %s199 = smul.addr %s198, 32
          %s200 = scalar_lea.hbm %s1, %s199
          %s202 = sshll.u32 %s192, 4
          %s203 = int_to_ptr.vmem [resolvable:$true] %s202
          %205 = dma.hbm_to_vmem [thread:$0]  %s200, 64, %s203, %s189
        $region28: #{tpu_custom_call.1} parent=19 // pred_fallthru
          _
      $region20: #{tpu_custom_call.1} parent=5 // pred_fallthru
        _
      %p206 = scmp.le.s32.totalorder 1, %s15
      %p207 = scmp.lt.s32.totalorder %s15, 5
      %p208 = pnand %p206, %p207
      %p209 = pneg %p208
      // Predicated region
      $region29: #{tpu_custom_call.1} parent=5 // pred_check
        _
      $region30: #{tpu_custom_call.1} parent=5 // pred_check_branch
        %211 = sbr.rel (%p208) target = $region32
      $region31: #{tpu_custom_call.1} parent=5 // pred_region
        %s212 = ssub.s32 %s15, 1
        %s213 = sand.u32 %s42, 1
        %s214 = scalar_lea.sflag [#allocation3], %s213
        %s215 = sand.u32 %s42, 1
        %s216 = smul.addr %s215, 4
        %s217 = scalar_lea.vmem [#allocation2], %s216
        // Predicated region
        $region33: #{tpu_custom_call.1} parent=31 // pred_check
          %p218 = pneg %p55
        $region34: #{tpu_custom_call.1} parent=31 // pred_check_branch
          %220 = sbr.rel (%p218) target = $region36
        $region35: #{tpu_custom_call.1} parent=31 // pred_region
          %221 = dma.done %s214, 64
        $region36: #{tpu_custom_call.1} parent=31 // pred_fallthru
          _
        %s222 = sand.u32 %s20, 1
        %s223 = scalar_lea.sflag [#allocation5], %s222
        %s224 = sand.u32 %s70, 1
        %s225 = smul.addr %s224, 4
        %s226 = scalar_lea.vmem [#allocation4], %s225
        // Predicated region
        $region37: #{tpu_custom_call.1} parent=31 // pred_check
          %p227 = pneg %p83
        $region38: #{tpu_custom_call.1} parent=31 // pred_check_branch
          %229 = sbr.rel (%p227) target = $region40
        $region39: #{tpu_custom_call.1} parent=31 // pred_region
          %230 = dma.done %s223, 64
        $region40: #{tpu_custom_call.1} parent=31 // pred_fallthru
          _
        // Predicated region
        $region41: #{tpu_custom_call.1} parent=31 // pred_check
          %p231 = pneg %p104
        $region42: #{tpu_custom_call.1} parent=31 // pred_check_branch
          %233 = sbr.rel (%p231) target = $region44
        $region43: #{tpu_custom_call.1} parent=31 // pred_region
          %234 = dma.done [#allocation5], 4096
        $region44: #{tpu_custom_call.1} parent=31 // pred_fallthru
          _
        %s235 = sand.u32 %s42, 1
        %s236 = scalar_lea.sflag [#allocation3], %s235
        %s237 = sand.u32 %s42, 1
        %s238 = smul.addr %s237, 4
        %s239 = scalar_lea.vmem [#allocation2], %s238
        %p240 = pneg %p55
        %p241 = pneg %p52
        %s242 = sand.u32 %s20, 1
        %s243 = scalar_lea.sflag [#allocation5], %s242
        %s244 = sand.u32 %s70, 1
        %s245 = smul.addr %s244, 4
        %s246 = scalar_lea.vmem [#allocation4], %s245
        %p247 = pneg %p83
        %p248 = pneg %p80
        %p249 = pneg %p104
        %p250 = pneg %p101
        %p251 = pneg %p132
        %p252 = pneg %p129
        %s253 = sadd.s32 %s24, %s25
        %p254 = scmp.lt.s32.totalorder %s253, 3
        %s255 = scalar_select %p254, %s253, 3
        %s256 = scalar_lea.vmem %s3, %s255
        %s257 = smul.u32 2, %s24
        %s258 = smul.u32 2, %s24
        %s259 = sadd.s32 %s24, %s25
        %p260 = scmp.lt.s32.totalorder %s259, 3
        %s261 = scalar_select %p260, %s259, 3
        %s262 = scalar_lea.vmem %s3, %s261
        %s263 = sadd.s32 %s24, %s25
        %v264 = vld [vmem:[%s217] sm:$0xf]
        %v265 = vld [vmem:[%s226] sm:$0xf]
        %v266 = vsub.f32 %v264, %v265
        %v267 = vand.u32 2147483647, %v266
        %v270 = vunpack.c.l.s4 1983009808
        %v271 = vunpack.c.0.s8 %v270
        %v272 = vlaneseq
        %v273 = vshrl.u32 %v272, 7
        %v274 = vsub.s32 %v271, %v273
        %v275 = vrot.slane %v267, %v274
        %v276 = vcombine.high %v275, %v275
        %vm279 = vcmask 1041408
        %v280 = vsel %vm279, %v275, 0.0
        %v281 = vsel %vm279, %v276, 0.0
        %v282 = vadd.f32 %v280, %v281
        %283 = vadd.xlane.f32.xlu0 %v282
        %v284 = vpop.xlane.xlu0 %283
        %v285 = vrot.slane %v284, 4
        %v286 = vadd.f32 %v284, %v285
        %v287 = vrot.slane %v286, 2
        %v288 = vadd.f32 %v286, %v287
        %v289 = vrot.slane %v288, 1
        %v290 = vadd.f32 %v288, %v289
        %s291 = vtos %v290
        %s292 = smul.f32 %s291, 0.00390625
        %v293 = vld [vmem:[#allocation6] sm:$0xff]
        %v294 = vld [vmem:[#allocation6 + $0x8] sm:$0xff]
        %v295 = vld [vmem:[#allocation6 + $0x10] sm:$0xff]
        %v296 = vld [vmem:[#allocation6 + $0x18] sm:$0xff]
        %v297 = vld [vmem:[#allocation6 + $0x20] sm:$0xff]
        %v298 = vld [vmem:[#allocation6 + $0x28] sm:$0xff]
        %v299 = vld [vmem:[#allocation6 + $0x30] sm:$0xff]
        %v300 = vld [vmem:[#allocation6 + $0x38] sm:$0xff]
        %v301 = vld [vmem:[#allocation6 + $0x40] sm:$0xff]
        %v302 = vld [vmem:[#allocation6 + $0x48] sm:$0xff]
        %v303 = vld [vmem:[#allocation6 + $0x50] sm:$0xff]
        %v304 = vld [vmem:[#allocation6 + $0x58] sm:$0xff]
        %v305 = vld [vmem:[#allocation6 + $0x60] sm:$0xff]
        %v306 = vld [vmem:[#allocation6 + $0x68] sm:$0xff]
        %v307 = vld [vmem:[#allocation6 + $0x70] sm:$0xff]
        %v308 = vld [vmem:[#allocation6 + $0x78] sm:$0xff]
        %v309 = vld [vmem:[#allocation6 + $0x80] sm:$0xff]
        %v310 = vld [vmem:[#allocation6 + $0x88] sm:$0xff]
        %v311 = vld [vmem:[#allocation6 + $0x90] sm:$0xff]
        %v312 = vld [vmem:[#allocation6 + $0x98] sm:$0xff]
        %v313 = vld [vmem:[#allocation6 + $0xa0] sm:$0xff]
        %v314 = vld [vmem:[#allocation6 + $0xa8] sm:$0xff]
        %v315 = vld [vmem:[#allocation6 + $0xb0] sm:$0xff]
        %v316 = vld [vmem:[#allocation6 + $0xb8] sm:$0xff]
        %v317 = vld [vmem:[#allocation6 + $0xc0] sm:$0xff]
        %v318 = vld [vmem:[#allocation6 + $0xc8] sm:$0xff]
        %v319 = vld [vmem:[#allocation6 + $0xd0] sm:$0xff]
        %v320 = vld [vmem:[#allocation6 + $0xd8] sm:$0xff]
        %v321 = vld [vmem:[#allocation6 + $0xe0] sm:$0xff]
        %v322 = vld [vmem:[#allocation6 + $0xe8] sm:$0xff]
        %v323 = vld [vmem:[#allocation6 + $0xf0] sm:$0xff]
        %v324 = vld [vmem:[#allocation6 + $0xf8] sm:$0xff]
        %v327 = vunpack.c.l.s4 1983009808
        %v328 = vunpack.c.0.s8 %v327
        %v329 = vlaneseq
        %v330 = vshrl.u32 %v329, 7
        %v331 = vsub.s32 %v328, %v330
        %v332 = vrot.slane %v266, %v331
        %v333 = vcombine.high %v332, %v332
        %336 = vmatprep.subr.mxu0 0.0
        %337 = vmatpush1.msra.mxu0 %v308
        %338 = vmatprep.subr.mxu0 0.0
        %339 = vmatpush1.msra.mxu0 %v307
        %340 = vmatprep.subr.mxu0 0.0
        %341 = vmatpush1.msra.mxu0 %v306
        %342 = vmatprep.subr.mxu0 0.0
        %343 = vmatpush1.msra.mxu0 %v305
        %344 = vmatprep.subr.mxu0 0.0
        %345 = vmatpush1.msra.mxu0 %v304
        %346 = vmatprep.subr.mxu0 0.0
        %347 = vmatpush1.msra.mxu0 %v303
        %348 = vmatprep.subr.mxu0 0.0
        %349 = vmatpush1.msra.mxu0 %v302
        %350 = vmatprep.subr.mxu0 0.0
        %351 = vmatpush1.msra.mxu0 %v301
        %352 = vmatprep.subr.mxu0 0.0
        %353 = vmatpush1.msra.mxu0 %v300
        %354 = vmatprep.subr.mxu0 0.0
        %355 = vmatpush1.msra.mxu0 %v299
        %356 = vmatprep.subr.mxu0 0.0
        %357 = vmatpush1.msra.mxu0 %v298
        %358 = vmatprep.subr.mxu0 0.0
        %359 = vmatpush1.msra.mxu0 %v297
        %360 = vmatprep.subr.mxu0 0.0
        %361 = vmatpush1.msra.mxu0 %v296
        %362 = vmatprep.subr.mxu0 0.0
        %363 = vmatpush1.msra.mxu0 %v295
        %364 = vmatprep.subr.mxu0 0.0
        %365 = vmatpush1.msra.mxu0 %v294
        %366 = vmatprep.subr.mxu0 0.0
        %367 = vmatpush1.msra.mxu0 %v293
        %368 = vmatprep.subr.mxu0 0.0
        %369 = vmatpush2.msra.mxu0 %v324
        %370 = vmatprep.subr.mxu0 0.0
        %371 = vmatpush2.msra.mxu0 %v323
        %372 = vmatprep.subr.mxu0 0.0
        %373 = vmatpush2.msra.mxu0 %v322
        %374 = vmatprep.subr.mxu0 0.0
        %375 = vmatpush2.msra.mxu0 %v321
        %376 = vmatprep.subr.mxu0 0.0
        %377 = vmatpush2.msra.mxu0 %v320
        %378 = vmatprep.subr.mxu0 0.0
        %379 = vmatpush2.msra.mxu0 %v319
        %380 = vmatprep.subr.mxu0 0.0
        %381 = vmatpush2.msra.mxu0 %v318
        %382 = vmatprep.subr.mxu0 0.0
        %383 = vmatpush2.msra.mxu0 %v317
        %384 = vmatprep.subr.mxu0 0.0
        %385 = vmatpush2.msra.mxu0 %v316
        %386 = vmatprep.subr.mxu0 0.0
        %387 = vmatpush2.msra.mxu0 %v315
        %388 = vmatprep.subr.mxu0 0.0
        %389 = vmatpush2.msra.mxu0 %v314
        %390 = vmatprep.subr.mxu0 0.0
        %391 = vmatpush2.msra.mxu0 %v313
        %392 = vmatprep.subr.mxu0 0.0
        %393 = vmatpush2.msra.mxu0 %v312
        %394 = vmatprep.subr.mxu0 0.0
        %395 = vmatpush2.msra.mxu0 %v311
        %396 = vmatprep.subr.mxu0 0.0
        %397 = vmatpush2.msra.mxu0 %v310
        %398 = vmatprep.subr.mxu0 0.0
        %399 = vmatpush2.msra.mxu0 %v309
        %400 = vmatprep.mubr.f32.mxu0 %v333
        %401 = vmatmul.mubr.f32.gmra.mxu0 %v332
        %v402 = vpop.f32.mrf.mxu0
        %v403 = vadd.f32 0.0, %v402
        %v404 = vpop.f32.mrf.mxu0
        %405 = vdwg.mxu0
        %v406 = vand.u32 2147483647, %v403
        %v407 = vsel %vm279, %v406, 0.0
        %408 = vadd.xlane.f32.xlu0 %v407
        %v409 = vpop.xlane.xlu0 %408
        %v410 = vrot.slane %v409, 4
        %v411 = vadd.f32 %v409, %v410
        %v412 = vrot.slane %v411, 2
        %v413 = vadd.f32 %v411, %v412
        %v414 = vrot.slane %v413, 1
        %v415 = vadd.f32 %v413, %v414
        %s416 = vtos %v415
        %s417 = sadd.f32 %s292, %s416
        %v418 = vstv %s417
        %v419 = vadd.f32 %v418, 0.0
        %vm420 = vcmask 0
        %421 = vst.msk [vmem:[%s262] sm:$0x1] %vm420, %v419
        %s422 = sadd.s32 %s24, %s25
        %p423 = scmp.lt.s32.totalorder %s422, 3
        %s424 = scalar_select %p423, %s422, 3
        %s425 = scalar_lea.vmem %s3, %s424
        // Predicated region
        $region45: #{tpu_custom_call.1} parent=31 // pred_check
          %p426 = pneg %p129
        $region46: #{tpu_custom_call.1} parent=31 // pred_check_branch
          %428 = sbr.rel (%p426) target = $region48
        $region47: #{tpu_custom_call.1} parent=31 // pred_region
          %s429 = sadd.s32 %s24, %s25
        $region48: #{tpu_custom_call.1} parent=31 // pred_fallthru
          _
      $region32: #{tpu_custom_call.1} parent=5 // pred_fallthru
        _
      %p430 = scmp.le.s32.totalorder 2, %s15
      // Predicated region
      $region49: #{tpu_custom_call.1} parent=5 // pred_check
        %p431 = pneg %p430
      $region50: #{tpu_custom_call.1} parent=5 // pred_check_branch
        %433 = sbr.rel (%p431) target = $region52
      $region51: #{tpu_custom_call.1} parent=5 // pred_region
        %s434 = ssub.s32 %s15, 2
        // Predicated region
        $region53: #{tpu_custom_call.1} parent=51 // pred_check
          %p435 = pneg %p135
        $region54: #{tpu_custom_call.1} parent=51 // pred_check_branch
          %437 = sbr.rel (%p435) target = $region56
        $region55: #{tpu_custom_call.1} parent=51 // pred_region
          %s438 = sadd.s32 %s26, %s27
          %p439 = scmp.lt.s32.totalorder %s438, 3
          %s440 = scalar_select %p439, %s438, 3
          %s441 = scalar_lea.vmem %s3, %s440
        $region56: #{tpu_custom_call.1} parent=51 // pred_fallthru
          _
      $region52: #{tpu_custom_call.1} parent=5 // pred_fallthru
        _
    $region6: #{tpu_custom_call.1} parent=1 // loop_footer
      %s19 = sadd.s32 1, %s15
    $region7: #{tpu_custom_call.1} parent=1 // loop_footer_branch
      %14 = sbr.rel target = $region3
    $region8: #{tpu_custom_call.1} parent=1 // loop_exit
      _
    %442 = vsyncpa [#allocation3], 1
    %s443 = scalar_lea.sflag [#allocation3], 1
    %444 = vsyncpa %s443, 1
    %445 = vsyncpa [#allocation5], 1
    %s446 = scalar_lea.sflag [#allocation5], 1
    %447 = vsyncpa %s446, 1

</llo_original>
